<compile_context>
chip_gen: v7x
topology: tpu7x:2x2x1
jax: 0.10.0
libtpu: 0.0.40
codegen_flags: <defaults>
</compile_context>

<pallas_src>
import functools
import math

import jax
import jax.numpy as jnp
from jax import lax
from jax.experimental import pallas as pl
from jax.experimental.pallas import tpu as pltpu


def _wrap_i32(v: int) -> int:
    """Wrap an unsigned 32-bit constant into Python-int int32 range."""
    v &= 0xFFFFFFFF
    return v - (1 << 32) if v >= (1 << 31) else v


_GOLD = _wrap_i32(0x9E3779B1)
_MIX1 = _wrap_i32(0x85EBCA6B)
_MIX2 = _wrap_i32(0xC2B2AE35)


def _data_embedding_kernel(seed_ref, x_ref, w_ref, b_ref, o_ref, *,
                           keep_prob: float, apply_dropout: bool,
                           d_model: int, tm: int, tn: int):
    # x_ref: (tm, Cin)  w_ref: (Cin, tn)  b_ref: (1, tn)  o_ref: (tm, tn)
    acc = jnp.dot(x_ref[...], w_ref[...], preferred_element_type=jnp.float32)
    acc = acc + b_ref[...].astype(jnp.float32)        # (1, tn) broadcasts over rows

    if apply_dropout:
        # Inverted dropout fused into the matmul epilogue (training mode only).
        # Stateless per-element hash (works on TPU and in interpret mode); the
        # random stream differs from torch's RNG, semantics are the same.
        i = pl.program_id(0)
        j = pl.program_id(1)
        rows = lax.broadcasted_iota(jnp.int32, acc.shape, 0) + i * tm
        cols = lax.broadcasted_iota(jnp.int32, acc.shape, 1) + j * tn
        idx = rows * jnp.int32(d_model) + cols          # global element id (wraps ok)

        h = idx * jnp.int32(_GOLD) + seed_ref[0]
        # fmix32-style mixing; logical right shift emulated with arith-shift+mask
        h = h ^ ((h >> 16) & jnp.int32(0xFFFF))
        h = h * jnp.int32(_MIX1)
        h = h ^ ((h >> 13) & jnp.int32(0x7FFFF))
        h = h * jnp.int32(_MIX2)
        h = h ^ ((h >> 16) & jnp.int32(0xFFFF))

        bits = h & jnp.int32(0x7FFFFFFF)                # uniform in [0, 2^31)
        threshold = jnp.int32(min(int(round(keep_prob * float(1 << 31))),
                                  (1 << 31) - 1))
        keep = bits < threshold                         # integer threshold compare
        acc = jnp.where(keep, acc * jnp.float32(1.0 / keep_prob), jnp.float32(0.0))

    o_ref[...] = acc.astype(o_ref.dtype)


def _pick_row_tile(m: int, preferred: int = 1024) -> int:
    """Sublane-aligned row tile; keep >= 2 row blocks when possible (2 TCs)."""
    if m <= 16:
        return m                                  # full extent is always legal
    if m <= preferred:
        half = (((m + 1) // 2) + 7) // 8 * 8      # ~half, multiple of 8
        return min(half, m) if half < m else m
    return preferred                              # 1024, multiple of 8


def _pick_col_tile(dm: int, tm: int) -> int:
    """Full d_model when the double-buffered f32 output tile stays under ~8 MiB."""
    if tm * dm * 4 * 2 <= (8 << 20):
        return dm
    tn = max(128, ((8 << 20) // (tm * 4 * 2)) // 128 * 128)
    return min(tn, dm)


def data_embedding_forward(x, x_mark, weight, bias, *,
                           dropout_p: float = 0.1,
                           training: bool = False,
                           seed: int = 0,
                           out_dtype=None):
    """x: (B, L, c_in); x_mark: (B, L_mark, c_in) or None;
    weight: (c_in, d_model) (== torch Linear.weight.T); bias: (d_model,)."""
    if x_mark is not None:
        x = jnp.concatenate([x, x_mark], axis=1)      # torch.cat([x, x_mark], dim=1)
    B, Ltot, Cin = x.shape
    Dm = weight.shape[1]
    out_dtype = x.dtype if out_dtype is None else out_dtype

    M = B * Ltot
    x2 = x.reshape(M, Cin)                            # lane-dense flattening
    w2 = weight.astype(x.dtype)
    b2 = bias.reshape(1, Dm).astype(x.dtype)
    seed_arr = jnp.asarray([seed], dtype=jnp.int32)

    tm = _pick_row_tile(M)
    tn = _pick_col_tile(Dm, tm)
    grid = (pl.cdiv(M, tm), pl.cdiv(Dm, tn))

    apply_dropout = bool(training) and dropout_p > 0.0
    kernel = functools.partial(_data_embedding_kernel,
                               keep_prob=1.0 - float(dropout_p),
                               apply_dropout=apply_dropout,
                               d_model=Dm, tm=tm, tn=tn)

    out2 = pl.pallas_call(
        kernel,
        out_shape=jax.ShapeDtypeStruct((M, Dm), out_dtype),
        grid_spec=pltpu.PrefetchScalarGridSpec(
            num_scalar_prefetch=1,
            grid=grid,
            in_specs=[
                pl.BlockSpec((tm, Cin), lambda i, j, seed: (i, 0)),
                pl.BlockSpec((Cin, tn), lambda i, j, seed: (0, j)),
                pl.BlockSpec((1, tn), lambda i, j, seed: (0, j)),
            ],
            out_specs=pl.BlockSpec((tm, tn), lambda i, j, seed: (i, j)),
        ),
        compiler_params=pltpu.CompilerParams(
            dimension_semantics=("parallel", "parallel"),
        ),
    )(seed_arr, x2, w2, b2)

    return out2.reshape(B, Ltot, Dm)


if __name__ == "__main__":
    B, L, L_mark, c_in, d_model = 2, 8, 4, 4, 32
    key = jax.random.PRNGKey(0)
    k1, k2, k3, k4 = jax.random.split(key, 4)

    def _bf16_exact(a):
        # Round inputs to bf16-representable values so the f32 reference matches
        # the MXU result tightly regardless of matmul pass configuration.
        return a.astype(jnp.bfloat16).astype(jnp.float32)

    x = _bf16_exact(jax.random.normal(k1, (B, L, c_in), dtype=jnp.float32))
    x_mark = _bf16_exact(jax.random.normal(k2, (B, L_mark, c_in), dtype=jnp.float32))
    weight = _bf16_exact(jax.random.normal(k3, (c_in, d_model), dtype=jnp.float32)
                         * (1.0 / math.sqrt(c_in)))
    bias = _bf16_exact(jax.random.normal(k4, (d_model,), dtype=jnp.float32) * 0.1)

    def ref_forward(xa, xm):
        xc = xa if xm is None else jnp.concatenate([xa, xm], axis=1)
        y = jnp.einsum("blc,cd->bld", xc, weight, precision=lax.Precision.HIGHEST)
        return y + bias

    # 1) eval mode with x_mark: cat along dim 1 -> Linear -> identity dropout
    out = jax.block_until_ready(
        data_embedding_forward(x, x_mark, weight, bias, dropout_p=0.1, training=False))
    ref = ref_forward(x, x_mark)
    assert out.shape == (B, L + L_mark, d_model)
    assert jnp.allclose(out, ref, atol=1e-4, rtol=1e-4), "eval (x_mark) mismatch"

    # 2) eval mode with x_mark=None
    out_none = jax.block_until_ready(
        data_embedding_forward(x, None, weight, bias, dropout_p=0.1, training=False))
    ref_none = ref_forward(x, None)
    assert out_none.shape == (B, L, d_model)
    assert jnp.allclose(out_none, ref_none, atol=1e-4, rtol=1e-4), "eval (None) mismatch"

    # 3) training mode: fused inverted dropout (stateless hash RNG).
    #    RNG stream differs from torch; check structure: every element is either
    #    exactly zero or the reference value scaled by 1/keep_prob.
    # TODO(synk): dropout random stream cannot bit-match torch.nn.Dropout.
    p = 0.1
    out_tr = jax.block_until_ready(
        data_embedding_forward(x, x_mark, weight, bias,
                               dropout_p=p, training=True, seed=1234))
    scaled = ref / (1.0 - p)
    structural_ok = jnp.all(
        (jnp.abs(out_tr) <= 1e-7)
        | (jnp.abs(out_tr - scaled) <= 1e-3 * (1.0 + jnp.abs(scaled))))
    assert out_tr.shape == ref.shape
    assert bool(structural_ok), "training dropout structure mismatch"
    assert bool(jnp.any(jnp.abs(out_tr) > 1e-7)), "dropout dropped everything"

    print("KERNEL_OK")
</pallas_src>

<mosaic_0001>
module attributes {stable_mosaic.version = 11 : i64} {
  func.func @_data_embedding_kernel(%arg0: i32, %arg1: i32, %arg2: memref<1xi32, #tpu.memory_space<smem>>, %arg3: memref<16x4xf32, #tpu.memory_space<vmem>>, %arg4: memref<4x32xf32, #tpu.memory_space<vmem>>, %arg5: memref<1x32xf32, #tpu.memory_space<vmem>>, %arg6: memref<16x32xf32, #tpu.memory_space<vmem>>) attributes {dimension_semantics = [#tpu.dimension_semantics<parallel>, #tpu.dimension_semantics<parallel>], iteration_bounds = array<i64: 2, 1>, scalar_prefetch = 1 : i64, scratch_operands = 0 : i64, tpu.core_type = #tpu.core_type<tc>, window_params = [{transform_indices = @transform_0, window_bounds = array<i64: 16, 4>}, {transform_indices = @transform_1, window_bounds = array<i64: 4, 32>}, {transform_indices = @transform_2, window_bounds = array<i64: 1, 32>}, {transform_indices = @transform_3, window_bounds = array<i64: 16, 32>}]} {
    %c0 = arith.constant 0 : index
    %c0_0 = arith.constant 0 : index
    %0 = vector.load %arg3[%c0, %c0_0] : memref<16x4xf32, #tpu.memory_space<vmem>>, vector<16x4xf32>
    %c0_1 = arith.constant 0 : index
    %c0_2 = arith.constant 0 : index
    %1 = vector.load %arg4[%c0_1, %c0_2] : memref<4x32xf32, #tpu.memory_space<vmem>>, vector<4x32xf32>
    %cst = arith.constant dense<0.000000e+00> : vector<16x32xf32>
    %2 = tpu.matmul %0, %1, %cst {dimension_numbers = #tpu.dot_dimension_numbers<[1], [0], [0], [1], [0, 0, 1, 1], [], []>} : vector<16x4xf32>, vector<4x32xf32>, vector<16x32xf32> -> vector<16x32xf32>
    %c0_3 = arith.constant 0 : index
    %c0_4 = arith.constant 0 : index
    %3 = vector.load %arg5[%c0_3, %c0_4] : memref<1x32xf32, #tpu.memory_space<vmem>>, vector<1x32xf32>
    %4 = vector.broadcast %3 : vector<1x32xf32> to vector<16x32xf32>
    %5 = arith.addf %2, %4 : vector<16x32xf32>
    %c0_5 = arith.constant 0 : index
    %c0_6 = arith.constant 0 : index
    %6 = vector.load %arg6[%c0_5, %c0_6] : memref<16x32xf32, #tpu.memory_space<vmem>>, vector<16x32xf32>
    tpu.vector_store %arg6[%c0_5, %c0_6], %5 {strides = array<i32>} : memref<16x32xf32, #tpu.memory_space<vmem>>, vector<16x32xf32>,
    return
  }
  func.func @transform_0(%arg0: i32, %arg1: i32, %arg2: memref<1xi32, #tpu.memory_space<smem>>) -> (i32, i32) {
    %c0_i32 = arith.constant 0 : i32
    %c0_i32_0 = arith.constant 0 : i32
    return %arg0, %c0_i32 : i32, i32
  }
  func.func @transform_1(%arg0: i32, %arg1: i32, %arg2: memref<1xi32, #tpu.memory_space<smem>>) -> (i32, i32) {
    %c0_i32 = arith.constant 0 : i32
    %c0_i32_0 = arith.constant 0 : i32
    return %c0_i32, %arg1 : i32, i32
  }
  func.func @transform_2(%arg0: i32, %arg1: i32, %arg2: memref<1xi32, #tpu.memory_space<smem>>) -> (i32, i32) {
    %c0_i32 = arith.constant 0 : i32
    %c0_i32_0 = arith.constant 0 : i32
    return %c0_i32, %arg1 : i32, i32
  }
  func.func @transform_3(%arg0: i32, %arg1: i32, %arg2: memref<1xi32, #tpu.memory_space<smem>>) -> (i32, i32) {
    %c0_i32 = arith.constant 0 : i32
    return %arg0, %arg1 : i32, i32
  }
}

</mosaic_0001>

<llo_original>
// kernel: tpu_custom_call.1
$region0: #{tpu_custom_call.1}
  #allocation0 [shape = 'u32[]', space=smem, size = 0x4, offset = 0x4, fixed_abs, tag = 'smem constant byte address 0x4 - core index']
  #allocation1 [shape = 'u32[144,128]{1,0:T(1,128)}', space=vmem, size = 0x12000, scoped, tag = 'internal scratch']
  #allocation2 [shape = 's32[1]{0}', space=sflag, size = 0x4, scoped, tag = 'scoped memory for tpu_custom_call.1']
  #allocation3 [shape = 's32[1]{0:T(128)S(6)}', space=smem, size = 0x200, scoped, tag = 'prefetched SMEM operand 0']
  %s0 = inlined_call_operand.<no memory space> [shape: s32[1], index: 0, kind: input, shape index: {}]
  %s1 = inlined_call_operand.vmem [shape: f32[24,4], index: 1, kind: input, shape index: {}]
  %s2 = inlined_call_operand.vmem [shape: f32[4,32], index: 2, kind: input, shape index: {}]
  %s3 = inlined_call_operand.vmem [shape: f32[1,32], index: 3, kind: input, shape index: {}]
  %s4 = inlined_call_operand.hbm [shape: f32[24,32], index: 4, kind: output, shape index: {}]
  %s5 = sld [smem:[#allocation0]]
  $region45: #{tpu_custom_call.1} parent=0
    _
  %s7 = ssub.s32 1, %s5
  %s8 = scalar_select 0, %s7, %s5
  %9 = sst [smem:[#allocation3]] %s0
  $region1: #{tpu_custom_call.1} parent=0
    #allocation4 [shape = 'u8[16384]{0}', space=vmem, size = 0x4000, scoped, tag = 'output window, operand 0']
    #allocation5 [shape = 's32[2]{0}', space=sflag, size = 0x8, scoped, tag = 'scoped memory for tpu_custom_call.1']
    %10 = vsyncpa [#allocation5], 0
    %s11 = scalar_lea.sflag [#allocation5], 1
    %12 = vsyncpa %s11, 0
    loop: start=0, step=1, limit=4
    $region2: #{tpu_custom_call.1} parent=1 // loop_pre_header
      _
    $region3: #{tpu_custom_call.1} parent=1 // loop_header
      %s14 = sphi 0, %s18
      %p15 = scmp.ge.s32.totalorder %s14, 4
      %s21 = sphi 0, %s33
      %s22 = sphi 0, %s29
      %s23 = sphi 0, %s21
      %s24 = sphi 0, %s22
      %s25 = sphi 0, %s23
      %s26 = sphi 0, %s24
      %s36 = sphi 0, %s38
      %s39 = sphi 0, %s36
      %s40 = sphi 0, %s39
      %s56 = sphi 0, %s40
      %s62 = sphi 0, %s64
      %s65 = sphi 0, %s62
      %s66 = sphi 0, %s65
      %s82 = sphi 0, %s66
      %s88 = sphi 0, %s90
      %s91 = sphi 0, %s88
      %s92 = sphi 0, %s91
      %s108 = sphi 0, %s92
      %s116 = sphi 0, %s118
      %s119 = sphi 0, %s116
      %s120 = sphi 0, %s119
      %s136 = sphi 0, %s120
    $region4: #{tpu_custom_call.1} parent=1 // loop_header_branch
      %17 = sbr.rel (%p15) target = $region8
    $region5: #{tpu_custom_call.1} parent=1 // loop_body
      %s19 = ssub.s32 %s14, 1
      %s20 = ssub.s32 %s14, 2
      %s27 = sadd.s32 1, %s22
      %p28 = scmp.ge.s32.totalorder %s27, 1
      %s29 = scalar_select %p28, 0, %s27
      %s30 = sadd.s32 1, %s21
      %s31 = scalar_select %p28, %s30, %s21
      %p32 = scmp.ge.s32.totalorder %s31, 2
      %s33 = scalar_select %p32, 0, %s31
      %s34 = ssub.s32 %s21, %s33
      %p35 = scmp.eq.s32.totalorder %s34, 0
      %s37 = sadd.s32 %s36, 1
      %s38 = scalar_select %p35, %s36, %s37
      %p41 = pneg %p35
      %p42 = scmp.eq.s32.totalorder %s14, 1
      %p43 = por %p41, %p42
      %p44 = scmp.ne.s32.totalorder %s36, %s39
      %p45 = scmp.eq.s32.totalorder %s14, 0
      %p46 = por %p44, %p45
      %p47 = scmp.ne.s32.totalorder %s36, %s39
      %p48 = scmp.eq.s32.totalorder %s19, 1
      %p49 = por %p47, %p48
      %p50 = scmp.ne.s32.totalorder %s39, %s40
      %p51 = scmp.eq.s32.totalorder %s19, 0
      %p52 = por %p50, %p51
      %p53 = scmp.ne.s32.totalorder %s39, %s40
      %p54 = scmp.eq.s32.totalorder %s20, 1
      %p55 = por %p53, %p54
      %p57 = scmp.ne.s32.totalorder %s40, %s56
      %p58 = scmp.eq.s32.totalorder %s20, 0
      %p59 = por %p57, %p58
      %s60 = ssub.s32 %s22, %s29
      %p61 = scmp.eq.s32.totalorder %s60, 0
      %s63 = sadd.s32 %s62, 1
      %s64 = scalar_select %p61, %s62, %s63
      %p67 = pneg %p61
      %p68 = scmp.eq.s32.totalorder %s14, 1
      %p69 = por %p67, %p68
      %p70 = scmp.ne.s32.totalorder %s62, %s65
      %p71 = scmp.eq.s32.totalorder %s14, 0
      %p72 = por %p70, %p71
      %p73 = scmp.ne.s32.totalorder %s62, %s65
      %p74 = scmp.eq.s32.totalorder %s19, 1
      %p75 = por %p73, %p74
      %p76 = scmp.ne.s32.totalorder %s65, %s66
      %p77 = scmp.eq.s32.totalorder %s19, 0
      %p78 = por %p76, %p77
      %p79 = scmp.ne.s32.totalorder %s65, %s66
      %p80 = scmp.eq.s32.totalorder %s20, 1
      %p81 = por %p79, %p80
      %p83 = scmp.ne.s32.totalorder %s66, %s82
      %p84 = scmp.eq.s32.totalorder %s20, 0
      %p85 = por %p83, %p84
      %s86 = ssub.s32 %s22, %s29
      %p87 = scmp.eq.s32.totalorder %s86, 0
      %s89 = sadd.s32 %s88, 1
      %s90 = scalar_select %p87, %s88, %s89
      %p93 = pneg %p87
      %p94 = scmp.eq.s32.totalorder %s14, 1
      %p95 = por %p93, %p94
      %p96 = scmp.ne.s32.totalorder %s88, %s91
      %p97 = scmp.eq.s32.totalorder %s14, 0
      %p98 = por %p96, %p97
      %p99 = scmp.ne.s32.totalorder %s88, %s91
      %p100 = scmp.eq.s32.totalorder %s19, 1
      %p101 = por %p99, %p100
      %p102 = scmp.ne.s32.totalorder %s91, %s92
      %p103 = scmp.eq.s32.totalorder %s19, 0
      %p104 = por %p102, %p103
      %p105 = scmp.ne.s32.totalorder %s91, %s92
      %p106 = scmp.eq.s32.totalorder %s20, 1
      %p107 = por %p105, %p106
      %p109 = scmp.ne.s32.totalorder %s92, %s108
      %p110 = scmp.eq.s32.totalorder %s20, 0
      %p111 = por %p109, %p110
      %s112 = ssub.s32 %s21, %s33
      %s113 = ssub.s32 %s22, %s29
      %s114 = sor.u32 %s112, %s113
      %p115 = scmp.eq.s32.totalorder %s114, 0
      %s117 = sadd.s32 %s116, 1
      %s118 = scalar_select %p115, %s116, %s117
      %p121 = pneg %p115
      %p122 = scmp.eq.s32.totalorder %s14, 1
      %p123 = por %p121, %p122
      %p124 = scmp.ne.s32.totalorder %s116, %s119
      %p125 = scmp.eq.s32.totalorder %s14, 0
      %p126 = por %p124, %p125
      %p127 = scmp.ne.s32.totalorder %s116, %s119
      %p128 = scmp.eq.s32.totalorder %s19, 1
      %p129 = por %p127, %p128
      %p130 = scmp.ne.s32.totalorder %s119, %s120
      %p131 = scmp.eq.s32.totalorder %s19, 0
      %p132 = por %p130, %p131
      %p133 = scmp.ne.s32.totalorder %s119, %s120
      %p134 = scmp.eq.s32.totalorder %s20, 1
      %p135 = por %p133, %p134
      %p137 = scmp.ne.s32.totalorder %s120, %s136
      %p138 = scmp.eq.s32.totalorder %s20, 0
      %p139 = por %p137, %p138
      %p140 = scmp.le.s32.totalorder 1, %s14
      %p141 = scmp.lt.s32.totalorder %s14, 3
      %p142 = pnand %p140, %p141
      %p143 = pneg %p142
      // Predicated region
      $region9: #{tpu_custom_call.1} parent=5 // pred_check
        _
      $region10: #{tpu_custom_call.1} parent=5 // pred_check_branch
        %145 = sbr.rel (%p142) target = $region12
      $region11: #{tpu_custom_call.1} parent=5 // pred_region
        %s146 = ssub.s32 %s14, 1
        // Predicated region
        $region13: #{tpu_custom_call.1} parent=11 // pred_check
          %p147 = pneg %p78
        $region14: #{tpu_custom_call.1} parent=11 // pred_check_branch
          %149 = sbr.rel (%p147) target = $region16
        $region15: #{tpu_custom_call.1} parent=11 // pred_region
          %p150 = scmp.lt.s32.totalorder %s24, 0
          %s151 = scalar_select %p150, %s24, 0
          %s152 = smul.addr %s151, 4
          %s153 = scalar_lea.vmem %s2, %s152
        $region16: #{tpu_custom_call.1} parent=11 // pred_fallthru
          _
        // Predicated region
        $region17: #{tpu_custom_call.1} parent=11 // pred_check
          %p154 = pneg %p104
        $region18: #{tpu_custom_call.1} parent=11 // pred_check_branch
          %156 = sbr.rel (%p154) target = $region20
        $region19: #{tpu_custom_call.1} parent=11 // pred_region
          %p157 = scmp.lt.s32.totalorder %s24, 0
          %s158 = scalar_select %p157, %s24, 0
          %s159 = scalar_lea.vmem %s3, %s158
        $region20: #{tpu_custom_call.1} parent=11 // pred_fallthru
          _
      $region12: #{tpu_custom_call.1} parent=5 // pred_fallthru
        _
      %p160 = scmp.lt.s32.totalorder %s14, 2
      // Predicated region
      $region21: #{tpu_custom_call.1} parent=5 // pred_check
        %p161 = pneg %p160
      $region22: #{tpu_custom_call.1} parent=5 // pred_check_branch
        %163 = sbr.rel (%p161) target = $region24
      $region23: #{tpu_custom_call.1} parent=5 // pred_region
        // Predicated region
        $region25: #{tpu_custom_call.1} parent=23 // pred_check
          %p164 = pneg %p46
        $region26: #{tpu_custom_call.1} parent=23 // pred_check_branch
          %166 = sbr.rel (%p164) target = $region28
        $region27: #{tpu_custom_call.1} parent=23 // pred_region
          %s167 = smul.u32 2, %s21
          %s168 = ssub.s32 3, %s167
          %p169 = scmp.lt.s32.totalorder %s168, 2
          %s170 = scalar_select %p169, %s168, 2
          %s171 = smul.u32 128, %s170
          %p172 = scmp.lt.s32.totalorder %s167, 2
          %s173 = scalar_select %p172, %s167, 2
          %s174 = smul.addr %s173, 8
          %s175 = scalar_lea.vmem %s1, %s174
          %s176 = smul.u32 2, %s21
          %s177 = ssub.s32 3, %s176
          %p178 = scmp.lt.s32.totalorder %s177, 2
          %s179 = scalar_select %p178, %s177, 2
          %s180 = smul.u32 128, %s179
        $region28: #{tpu_custom_call.1} parent=23 // pred_fallthru
          _
      $region24: #{tpu_custom_call.1} parent=5 // pred_fallthru
        _
      %p181 = scmp.le.s32.totalorder 1, %s14
      %p182 = scmp.lt.s32.totalorder %s14, 3
      %p183 = pnand %p181, %p182
      %p184 = pneg %p183
      // Predicated region
      $region29: #{tpu_custom_call.1} parent=5 // pred_check
        _
      $region30: #{tpu_custom_call.1} parent=5 // pred_check_branch
        %186 = sbr.rel (%p183) target = $region32
      $region31: #{tpu_custom_call.1} parent=5 // pred_region
        %s187 = ssub.s32 %s14, 1
        %s188 = smul.u32 2, %s23
        %s189 = ssub.s32 3, %s188
        %p190 = scmp.lt.s32.totalorder %s189, 2
        %s191 = scalar_select %p190, %s189, 2
        %s192 = smul.u32 128, %s191
        %p193 = scmp.lt.s32.totalorder %s188, 2
        %s194 = scalar_select %p193, %s188, 2
        %s195 = smul.addr %s194, 8
        %s196 = scalar_lea.vmem %s1, %s195
        %p197 = pneg %p52
        %p198 = pneg %p49
        %p199 = scmp.lt.s32.totalorder %s24, 0
        %s200 = scalar_select %p199, %s24, 0
        %s201 = smul.addr %s200, 4
        %s202 = scalar_lea.vmem %s2, %s201
        %p203 = pneg %p78
        %p204 = pneg %p75
        %p205 = scmp.lt.s32.totalorder %s24, 0
        %s206 = scalar_select %p205, %s24, 0
        %s207 = scalar_lea.vmem %s3, %s206
        %p208 = pneg %p104
        %p209 = pneg %p101
        %p210 = pneg %p132
        %p211 = pneg %p129
        %s212 = sand.u32 %s119, 1
        %s213 = scalar_lea.sflag [#allocation5], %s212
        %s214 = sand.u32 %s119, 1
        %s215 = smul.addr %s214, 16
        %s216 = scalar_lea.vmem [#allocation4], %s215
        %s217 = smul.u32 2, %s23
        %s218 = ssub.s32 3, %s217
        %p219 = scmp.lt.s32.totalorder %s218, 2
        %s220 = scalar_select %p219, %s218, 2
        %s221 = smul.u32 128, %s220
        %p222 = scmp.lt.s32.totalorder %s217, 2
        %s223 = scalar_select %p222, %s217, 2
        %s224 = smul.addr %s223, 8
        %s225 = scalar_lea.vmem %s1, %s224
        %s226 = smul.u32 2, %s23
        %s227 = ssub.s32 3, %s226
        %p228 = scmp.lt.s32.totalorder %s227, 2
        %s229 = scalar_select %p228, %s227, 2
        %s230 = smul.u32 128, %s229
        %p231 = scmp.lt.s32.totalorder %s24, 0
        %s232 = scalar_select %p231, %s24, 0
        %s233 = smul.addr %s232, 4
        %s234 = scalar_lea.vmem %s2, %s233
        %p235 = scmp.lt.s32.totalorder %s24, 0
        %s236 = scalar_select %p235, %s24, 0
        %s237 = scalar_lea.vmem %s3, %s236
        %s238 = smul.u32 2, %s23
        %s239 = ssub.s32 3, %s238
        %p240 = scmp.lt.s32.totalorder %s239, 2
        %s241 = scalar_select %p240, %s239, 2
        %s242 = smul.u32 128, %s241
        %v243 = vld [vmem:[%s225] sm:$0xff]
        %v244 = vld [vmem:[%s225 + $0x8] sm:$0xff]
        %v245 = vld [vmem:[%s234] sm:$0xf]
        %v246 = vld [vmem:[%s237] sm:$0x1]
        %v248 = vlaneseq
        %v249 = vshrl.u32 %v248, 7
        %v250 = vsub.s32 0, %v249
        %v251 = vrot.slane %v246, %v250
        %vm253 = vcmask 31744
        %v255 = vsel %vm253, %v243, 0
        %v258 = vsel %vm253, %v244, 0
        %vm260 = vcmask 1043456
        %v262 = vsel %vm260, %v245, 0
        %264 = vmatprep.subr.mxu0 0.0
        %265 = vmatpush1.msra.mxu0 %v262
        %266 = vmatprep.subr.mxu0 0.0
        %267 = vmatpush1.msra.mxu0 0.0
        %268 = vmatprep.subr.mxu0 0.0
        %269 = vmatpush1.msra.mxu0 0.0
        %270 = vmatprep.subr.mxu0 0.0
        %271 = vmatpush1.msra.mxu0 0.0
        %272 = vmatprep.subr.mxu0 0.0
        %273 = vmatpush1.msra.mxu0 0.0
        %274 = vmatprep.subr.mxu0 0.0
        %275 = vmatpush1.msra.mxu0 0.0
        %276 = vmatprep.subr.mxu0 0.0
        %277 = vmatpush1.msra.mxu0 0.0
        %278 = vmatprep.subr.mxu0 0.0
        %279 = vmatpush1.msra.mxu0 0.0
        %280 = vmatprep.subr.mxu0 0.0
        %281 = vmatpush1.msra.mxu0 0.0
        %282 = vmatprep.subr.mxu0 0.0
        %283 = vmatpush1.msra.mxu0 0.0
        %284 = vmatprep.subr.mxu0 0.0
        %285 = vmatpush1.msra.mxu0 0.0
        %286 = vmatprep.subr.mxu0 0.0
        %287 = vmatpush1.msra.mxu0 0.0
        %288 = vmatprep.subr.mxu0 0.0
        %289 = vmatpush1.msra.mxu0 0.0
        %290 = vmatprep.subr.mxu0 0.0
        %291 = vmatpush1.msra.mxu0 0.0
        %292 = vmatprep.subr.mxu0 0.0
        %293 = vmatpush1.msra.mxu0 0.0
        %294 = vmatprep.subr.mxu0 0.0
        %295 = vmatpush1.msra.mxu0 0.0
        %296 = vmatprep.subr.mxu0 0.0
        %297 = vmatpush1.msra.mxu0 0.0
        %298 = vmatprep.subr.mxu0 0.0
        %299 = vmatpush1.msra.mxu0 0.0
        %300 = vmatprep.subr.mxu0 0.0
        %301 = vmatpush1.msra.mxu0 0.0
        %302 = vmatprep.subr.mxu0 0.0
        %303 = vmatpush1.msra.mxu0 0.0
        %304 = vmatprep.subr.mxu0 0.0
        %305 = vmatpush1.msra.mxu0 0.0
        %306 = vmatprep.subr.mxu0 0.0
        %307 = vmatpush1.msra.mxu0 0.0
        %308 = vmatprep.subr.mxu0 0.0
        %309 = vmatpush1.msra.mxu0 0.0
        %310 = vmatprep.subr.mxu0 0.0
        %311 = vmatpush1.msra.mxu0 0.0
        %312 = vmatprep.subr.mxu0 0.0
        %313 = vmatpush1.msra.mxu0 0.0
        %314 = vmatprep.subr.mxu0 0.0
        %315 = vmatpush1.msra.mxu0 0.0
        %316 = vmatprep.subr.mxu0 0.0
        %317 = vmatpush1.msra.mxu0 0.0
        %318 = vmatprep.subr.mxu0 0.0
        %319 = vmatpush1.msra.mxu0 0.0
        %320 = vmatprep.subr.mxu0 0.0
        %321 = vmatpush1.msra.mxu0 0.0
        %322 = vmatprep.subr.mxu0 0.0
        %323 = vmatpush1.msra.mxu0 0.0
        %324 = vmatprep.subr.mxu0 0.0
        %325 = vmatpush1.msra.mxu0 0.0
        %326 = vmatprep.subr.mxu0 0.0
        %327 = vmatpush1.msra.mxu0 0.0
        %328 = vmatprep.mubr.f32.mxu0 0.0
        %329 = vmatmul.mubr.f32.gmra.mrb[0].mxu0 %v255
        %v330 = vpop.f32.mrb[0].mxu0
        %v331 = vadd.f32 %v251, %v330
        %v332 = vpop.f32.mrb[0].mxu0
        %333 = vmatprep.mubr.f32.mxu0 0.0
        %334 = vmatmul.mubr.f32.gmra.mrb[0].mxu0 %v258
        %v335 = vpop.f32.mrb[0].mxu0
        %v336 = vadd.f32 %v251, %v335
        %v337 = vpop.f32.mrb[0].mxu0
        %338 = vdwg.mxu0
        %vm339 = vcmask 261120
        %340 = vst.msk [vmem:[%s216] sm:$0xff] %vm339, %v331
        %341 = vst.msk [vmem:[%s216 + $0x8] sm:$0xff] %vm339, %v336
        %s342 = sand.u32 %s119, 1
        %s343 = scalar_lea.sflag [#allocation5], %s342
        %s344 = sand.u32 %s119, 1
        %s345 = smul.addr %s344, 16
        %s346 = scalar_lea.vmem [#allocation4], %s345
        // Predicated region
        $region33: #{tpu_custom_call.1} parent=31 // pred_check
          %p347 = pneg %p129
        $region34: #{tpu_custom_call.1} parent=31 // pred_check_branch
          %349 = sbr.rel (%p347) target = $region36
        $region35: #{tpu_custom_call.1} parent=31 // pred_region
          %s350 = smul.u32 2, %s23
          %s351 = ssub.s32 3, %s350
          %p352 = scmp.lt.s32.totalorder %s351, 2
          %s353 = scalar_select %p352, %s351, 2
          %s354 = smul.u32 128, %s353
          %s356 = ssub.s32 256, %s354
          %357 = vsyncadd %s343, %s356
          %p358 = scmp.ne.s32.totalorder 0, %s354
          %s359 = sadd.s32 %s24, %s350
          %s360 = smul.addr %s359, 128
          %s361 = scalar_lea.hbm %s4, %s360
          %s362 = smul.u32 8, %s353
          %s363 = sshll.u32 %s346, 4
          %s364 = int_to_ptr.vmem [resolvable:$true] %s363
          %s365 = sshll.u32 %s362, 4
          %369 = dma.vmem_to_hbm [thread:$0]  (%p358), %s364, %s365, %s361, %s343, 128, 128, 8
        $region36: #{tpu_custom_call.1} parent=31 // pred_fallthru
          _
      $region32: #{tpu_custom_call.1} parent=5 // pred_fallthru
        _
      %p370 = scmp.le.s32.totalorder 2, %s14
      // Predicated region
      $region37: #{tpu_custom_call.1} parent=5 // pred_check
        %p371 = pneg %p370
      $region38: #{tpu_custom_call.1} parent=5 // pred_check_branch
        %373 = sbr.rel (%p371) target = $region40
      $region39: #{tpu_custom_call.1} parent=5 // pred_region
        %s374 = ssub.s32 %s14, 2
        // Predicated region
        $region41: #{tpu_custom_call.1} parent=39 // pred_check
          %p375 = pneg %p135
        $region42: #{tpu_custom_call.1} parent=39 // pred_check_branch
          %377 = sbr.rel (%p375) target = $region44
        $region43: #{tpu_custom_call.1} parent=39 // pred_region
          %s378 = sand.u32 %s120, 1
          %s379 = scalar_lea.sflag [#allocation5], %s378
          %s380 = sand.u32 %s120, 1
          %s381 = smul.addr %s380, 16
          %s382 = scalar_lea.vmem [#allocation4], %s381
          %383 = dma.done %s379, 256
        $region44: #{tpu_custom_call.1} parent=39 // pred_fallthru
          _
      $region40: #{tpu_custom_call.1} parent=5 // pred_fallthru
        _
    $region6: #{tpu_custom_call.1} parent=1 // loop_footer
      %s18 = sadd.s32 1, %s14
    $region7: #{tpu_custom_call.1} parent=1 // loop_footer_branch
      %13 = sbr.rel target = $region3
    $region8: #{tpu_custom_call.1} parent=1 // loop_exit
      _
    %384 = vsyncpa [#allocation5], 1
    %s385 = scalar_lea.sflag [#allocation5], 1
    %386 = vsyncpa %s385, 1

</llo_original>
